<compile_context>
chip_gen: v7x
topology: tpu7x:2x2x1
jax: 0.10.0
libtpu: 0.0.40
codegen_flags: <defaults>
</compile_context>

<pallas_src>
import functools

import jax
import jax.numpy as jnp
from jax import lax
from jax.experimental import pallas as pl
from jax.experimental.pallas import tpu as pltpu


_INV_SQRT2 = 0.7071067811865476


def _mlp_kernel(x_ref, w1_ref, b1_ref, w2_ref, b2_ref, o_ref, acc_ref):
    j = pl.program_id(1)
    nj = pl.num_programs(1)

    @pl.when(j == 0)
    def _():
        acc_ref[...] = jnp.zeros_like(acc_ref)

    # fc1 partial: (tm, C_in) @ (C_in, th) -> f32 (native-dtype operands on MXU)
    h = jnp.dot(x_ref[...], w1_ref[...], preferred_element_type=jnp.float32)
    h = h + b1_ref[...].astype(jnp.float32)

    # Exact GELU (erf formulation) in f32 — matches torch.nn.GELU default.
    h = 0.5 * h * (1.0 + lax.erf(h * jnp.float32(_INV_SQRT2)))

    # fc2 partial, accumulated over the hidden-dim grid axis in f32 scratch.
    h = h.astype(x_ref.dtype)
    acc_ref[...] += jnp.dot(h, w2_ref[...], preferred_element_type=jnp.float32)

    @pl.when(j == nj - 1)
    def _():
        o_ref[...] = (acc_ref[...] + b2_ref[...].astype(jnp.float32)).astype(o_ref.dtype)


def _round_up(x, m):
    return ((x + m - 1) // m) * m


@functools.partial(jax.jit, static_argnames=("tm", "th"))
def mlp_pallas(x, w1, b1, w2, b2, *, tm=256, th=512):
    """x: (B, N, C_in) -> (B, N, C_out). Weights: w1 (C_in, H), w2 (H, C_out)."""
    B, N, C_in = x.shape
    H = w1.shape[1]
    C_out = w2.shape[1]
    M = B * N

    # --- pick effective tile sizes satisfying TPU (8, 128) block rules ---
    tm_eff = min(tm, _round_up(M, 8))           # rows tile (multiple of 8)
    th_eff = min(th, _round_up(H, 128))         # hidden tile (multiple of 128)

    M_pad = _round_up(M, tm_eff)
    H_pad = _round_up(H, th_eff)

    x2 = x.reshape(M, C_in)
    if M_pad != M:
        x2 = jnp.pad(x2, ((0, M_pad - M), (0, 0)))

    # Zero-padding along H is exact: GELU(0) == 0 and padded W2 rows are zero.
    w1p = jnp.pad(w1, ((0, 0), (0, H_pad - H))) if H_pad != H else w1
    b1p = jnp.pad(b1, ((0, H_pad - H),)) if H_pad != H else b1
    w2p = jnp.pad(w2, ((0, H_pad - H), (0, 0))) if H_pad != H else w2

    b1_2d = b1p.reshape(1, H_pad)
    b2_2d = b2.reshape(1, C_out)

    grid = (M_pad // tm_eff, H_pad // th_eff)

    # Explicit scoped-VMEM budget: double-buffered tiles + f32 accumulator,
    # with headroom, capped at 48 MiB (safe on v7x's 64 MiB physical VMEM).
    itemsize = jnp.dtype(x.dtype).itemsize
    vmem_bytes = (
        2 * tm_eff * C_in * itemsize        # x tile (double buffered)
        + 2 * C_in * th_eff * itemsize      # W1 tile
        + 2 * th_eff * C_out * itemsize     # W2 tile
        + 2 * (th_eff + C_out) * itemsize   # biases
        + 2 * tm_eff * C_out * itemsize     # output tile
        + tm_eff * C_out * 4                # f32 accumulator scratch
    )
    vmem_limit = int(min(max(int(vmem_bytes * 1.5) + (2 << 20), 32 << 20), 48 << 20))

    out2 = pl.pallas_call(
        _mlp_kernel,
        out_shape=jax.ShapeDtypeStruct((M_pad, C_out), x.dtype),
        grid_spec=pltpu.PrefetchScalarGridSpec(
            num_scalar_prefetch=0,
            grid=grid,
            in_specs=[
                pl.BlockSpec((tm_eff, C_in), lambda i, j: (i, 0)),    # x rows tile
                pl.BlockSpec((C_in, th_eff), lambda i, j: (0, j)),    # W1 hidden slab
                pl.BlockSpec((1, th_eff), lambda i, j: (0, j)),       # b1 hidden slab
                pl.BlockSpec((th_eff, C_out), lambda i, j: (j, 0)),   # W2 hidden slab
                pl.BlockSpec((1, C_out), lambda i, j: (0, 0)),        # b2
            ],
            out_specs=pl.BlockSpec((tm_eff, C_out), lambda i, j: (i, 0)),
            scratch_shapes=[pltpu.VMEM((tm_eff, C_out), jnp.float32)],
        ),
        compiler_params=pltpu.CompilerParams(
            dimension_semantics=("parallel", "arbitrary"),
            vmem_limit_bytes=vmem_limit,
        ),
    )(x2, w1p, b1_2d, w2p, b2_2d)

    return out2[:M].reshape(B, N, C_out)


def _reference_mlp(x, w1, b1, w2, b2):
    h = jnp.einsum("bnc,ch->bnh", x, w1) + b1
    h = 0.5 * h * (1.0 + lax.erf(h / jnp.sqrt(2.0)))
    return jnp.einsum("bnh,ho->bno", h, w2) + b2


if __name__ == "__main__":
    # Small transformer-style MLP block shapes (lane-dense: C, H multiples of 128):
    # batch=2, seq=16, in_features=128, hidden_features=256, out_features=128
    B, N, C_in, H = 2, 16, 128, 256
    C_out = C_in

    key = jax.random.PRNGKey(0)
    kx, kw1, kb1, kw2, kb2 = jax.random.split(key, 5)

    x = jax.random.normal(kx, (B, N, C_in), dtype=jnp.float32)
    # Deterministic synthetic parameter init (uniform, roughly nn.Linear scale).
    w1 = jax.random.uniform(kw1, (C_in, H), minval=-1.0, maxval=1.0) / jnp.sqrt(C_in)
    b1 = jax.random.uniform(kb1, (H,), minval=-1.0, maxval=1.0) / jnp.sqrt(C_in)
    w2 = jax.random.uniform(kw2, (H, C_out), minval=-1.0, maxval=1.0) / jnp.sqrt(H)
    b2 = jax.random.uniform(kb2, (C_out,), minval=-1.0, maxval=1.0) / jnp.sqrt(H)

    out = mlp_pallas(x, w1, b1, w2, b2)
    out = jax.block_until_ready(out)

    ref = _reference_mlp(x, w1, b1, w2, b2)
    assert out.shape == (B, N, C_out), out.shape
    err = float(jnp.max(jnp.abs(out - ref)))
    assert jnp.allclose(out, ref, atol=1e-4, rtol=1e-4), err

    print("KERNEL_OK")
</pallas_src>

<mosaic_0001>
module attributes {stable_mosaic.version = 11 : i64} {
  func.func @_mlp_kernel(%arg0: i32, %arg1: i32, %arg2: memref<32x128xf32, #tpu.memory_space<vmem>>, %arg3: memref<128x256xf32, #tpu.memory_space<vmem>>, %arg4: memref<1x256xf32, #tpu.memory_space<vmem>>, %arg5: memref<256x128xf32, #tpu.memory_space<vmem>>, %arg6: memref<1x128xf32, #tpu.memory_space<vmem>>, %arg7: memref<32x128xf32, #tpu.memory_space<vmem>>, %arg8: memref<32x128xf32, #tpu.memory_space<vmem>>) attributes {dimension_semantics = [#tpu.dimension_semantics<parallel>, #tpu.dimension_semantics<arbitrary>], iteration_bounds = array<i64: 1, 1>, scalar_prefetch = 0 : i64, scratch_operands = 1 : i64, tpu.core_type = #tpu.core_type<tc>, window_params = [{transform_indices = @transform_0, window_bounds = array<i64: 32, 128>}, {transform_indices = @transform_1, window_bounds = array<i64: 128, 256>}, {transform_indices = @transform_2, window_bounds = array<i64: 1, 256>}, {transform_indices = @transform_3, window_bounds = array<i64: 256, 128>}, {pipeline_mode = #tpu.pipeline_mode<synchronous>, transform_indices = @transform_4, window_bounds = array<i64: 1, 128>}, {transform_indices = @transform_5, window_bounds = array<i64: 32, 128>}]} {
    %c0_i32 = arith.constant 0 : i32
    %0 = arith.cmpi eq, %arg1, %c0_i32 : i32
    %1 = arith.extui %0 : i1 to i32
    %c0_i32_0 = arith.constant 0 : i32
    %2 = arith.cmpi ne, %1, %c0_i32_0 : i32
    scf.if %2 {
      %cst_18 = arith.constant 0.000000e+00 : f32
      %25 = vector.broadcast %cst_18 : f32 to vector<32x128xf32>
      %c0_19 = arith.constant 0 : index
      %c0_20 = arith.constant 0 : index
      %26 = vector.load %arg8[%c0_19, %c0_20] : memref<32x128xf32, #tpu.memory_space<vmem>>, vector<32x128xf32>
      tpu.vector_store %arg8[%c0_19, %c0_20], %25 {strides = array<i32>} : memref<32x128xf32, #tpu.memory_space<vmem>>, vector<32x128xf32>,
    } else {
    }
    %c0 = arith.constant 0 : index
    %c0_1 = arith.constant 0 : index
    %3 = vector.load %arg2[%c0, %c0_1] : memref<32x128xf32, #tpu.memory_space<vmem>>, vector<32x128xf32>
    %c0_2 = arith.constant 0 : index
    %c0_3 = arith.constant 0 : index
    %4 = vector.load %arg3[%c0_2, %c0_3] : memref<128x256xf32, #tpu.memory_space<vmem>>, vector<128x256xf32>
    %cst = arith.constant dense<0.000000e+00> : vector<32x256xf32>
    %5 = tpu.matmul %3, %4, %cst {dimension_numbers = #tpu.dot_dimension_numbers<[1], [0], [0], [1], [0, 0, 1, 1], [], []>} : vector<32x128xf32>, vector<128x256xf32>, vector<32x256xf32> -> vector<32x256xf32>
    %c0_4 = arith.constant 0 : index
    %c0_5 = arith.constant 0 : index
    %6 = vector.load %arg4[%c0_4, %c0_5] : memref<1x256xf32, #tpu.memory_space<vmem>>, vector<1x256xf32>
    %7 = vector.broadcast %6 : vector<1x256xf32> to vector<32x256xf32>
    %8 = arith.addf %5, %7 : vector<32x256xf32>
    %cst_6 = arith.constant 5.000000e-01 : f32
    %9 = vector.broadcast %cst_6 : f32 to vector<32x256xf32>
    %10 = arith.mulf %9, %8 : vector<32x256xf32>
    %cst_7 = arith.constant 0.707106769 : f32
    %11 = vector.broadcast %cst_7 : f32 to vector<32x256xf32>
    %12 = arith.mulf %8, %11 : vector<32x256xf32>
    %13 = math.erf %12 : vector<32x256xf32>
    %cst_8 = arith.constant 1.000000e+00 : f32
    %14 = vector.broadcast %cst_8 : f32 to vector<32x256xf32>
    %15 = arith.addf %14, %13 : vector<32x256xf32>
    %16 = arith.mulf %10, %15 : vector<32x256xf32>
    %c0_9 = arith.constant 0 : index
    %c0_10 = arith.constant 0 : index
    %17 = vector.load %arg8[%c0_9, %c0_10] : memref<32x128xf32, #tpu.memory_space<vmem>>, vector<32x128xf32>
    %c0_11 = arith.constant 0 : index
    %c0_12 = arith.constant 0 : index
    %18 = vector.load %arg5[%c0_11, %c0_12] : memref<256x128xf32, #tpu.memory_space<vmem>>, vector<256x128xf32>
    %cst_13 = arith.constant dense<0.000000e+00> : vector<32x128xf32>
    %19 = tpu.matmul %16, %18, %cst_13 {dimension_numbers = #tpu.dot_dimension_numbers<[1], [0], [0], [1], [0, 0, 1, 1], [], []>} : vector<32x256xf32>, vector<256x128xf32>, vector<32x128xf32> -> vector<32x128xf32>
    %20 = arith.addf %17, %19 : vector<32x128xf32>
    %c0_14 = arith.constant 0 : index
    %c0_15 = arith.constant 0 : index
    %21 = vector.load %arg8[%c0_14, %c0_15] : memref<32x128xf32, #tpu.memory_space<vmem>>, vector<32x128xf32>
    tpu.vector_store %arg8[%c0_14, %c0_15], %20 {strides = array<i32>} : memref<32x128xf32, #tpu.memory_space<vmem>>, vector<32x128xf32>,
    %c0_i32_16 = arith.constant 0 : i32
    %22 = arith.cmpi eq, %arg1, %c0_i32_16 : i32
    %23 = arith.extui %22 : i1 to i32
    %c0_i32_17 = arith.constant 0 : i32
    %24 = arith.cmpi ne, %23, %c0_i32_17 : i32
    scf.if %24 {
      %c0_18 = arith.constant 0 : index
      %c0_19 = arith.constant 0 : index
      %25 = vector.load %arg8[%c0_18, %c0_19] : memref<32x128xf32, #tpu.memory_space<vmem>>, vector<32x128xf32>
      %c0_20 = arith.constant 0 : index
      %c0_21 = arith.constant 0 : index
      %26 = vector.load %arg6[%c0_20, %c0_21] : memref<1x128xf32, #tpu.memory_space<vmem>>, vector<1x128xf32>
      %27 = vector.broadcast %26 : vector<1x128xf32> to vector<32x128xf32>
      %28 = arith.addf %25, %27 : vector<32x128xf32>
      %c0_22 = arith.constant 0 : index
      %c0_23 = arith.constant 0 : index
      %29 = vector.load %arg7[%c0_22, %c0_23] : memref<32x128xf32, #tpu.memory_space<vmem>>, vector<32x128xf32>
      tpu.vector_store %arg7[%c0_22, %c0_23], %28 {strides = array<i32>} : memref<32x128xf32, #tpu.memory_space<vmem>>, vector<32x128xf32>,
    } else {
    }
    return
  }
  func.func @transform_0(%arg0: i32, %arg1: i32) -> (i32, i32) {
    %c0_i32 = arith.constant 0 : i32
    %c0_i32_0 = arith.constant 0 : i32
    return %arg0, %c0_i32 : i32, i32
  }
  func.func @transform_1(%arg0: i32, %arg1: i32) -> (i32, i32) {
    %c0_i32 = arith.constant 0 : i32
    %c0_i32_0 = arith.constant 0 : i32
    return %c0_i32, %arg1 : i32, i32
  }
  func.func @transform_2(%arg0: i32, %arg1: i32) -> (i32, i32) {
    %c0_i32 = arith.constant 0 : i32
    %c0_i32_0 = arith.constant 0 : i32
    return %c0_i32, %arg1 : i32, i32
  }
  func.func @transform_3(%arg0: i32, %arg1: i32) -> (i32, i32) {
    %c0_i32 = arith.constant 0 : i32
    %c0_i32_0 = arith.constant 0 : i32
    return %arg1, %c0_i32 : i32, i32
  }
  func.func @transform_4(%arg0: i32, %arg1: i32) -> (i32, i32) {
    %c0_i32 = arith.constant 0 : i32
    %c0_i32_0 = arith.constant 0 : i32
    %c0_i32_1 = arith.constant 0 : i32
    return %c0_i32, %c0_i32_0 : i32, i32
  }
  func.func @transform_5(%arg0: i32, %arg1: i32) -> (i32, i32) {
    %c0_i32 = arith.constant 0 : i32
    %c0_i32_0 = arith.constant 0 : i32
    return %arg0, %c0_i32 : i32, i32
  }
}

</mosaic_0001>

<llo_original>
// kernel: mlp_pallas.1
$region0: #{mlp_pallas.1}
  #allocation0 [shape = 'u32[]', space=smem, size = 0x4, offset = 0x4, fixed_abs, tag = 'smem constant byte address 0x4 - core index']
  #allocation1 [shape = 'u32[144,128]{1,0:T(1,128)}', space=vmem, size = 0x12000, scoped, tag = 'internal scratch']
  #allocation2 [shape = 'f32[32,128]{1,0:T(8,128)}', space=vmem, size = 0x4000, scoped, tag = 'scratch operand']
  %s0 = inlined_call_operand.hbm [shape: f32[32,128], index: 0, kind: input, shape index: {}]
  %s1 = inlined_call_operand.hbm [shape: f32[128,256], index: 1, kind: input, shape index: {}]
  %s2 = inlined_call_operand.vmem [shape: f32[1,256], index: 2, kind: input, shape index: {}]
  %s3 = inlined_call_operand.hbm [shape: f32[256,128], index: 3, kind: input, shape index: {}]
  %s4 = inlined_call_operand.vmem [shape: f32[1,128], index: 4, kind: input, shape index: {}]
  %s5 = inlined_call_operand.hbm [shape: f32[32,128], index: 5, kind: output, shape index: {}]
  %s6 = sld [smem:[#allocation0]]
  $region50: #{mlp_pallas.1} parent=0
    _
  %s8 = ssub.s32 1, %s6
  %s9 = scalar_select 0, %s8, %s6
  $region1: #{mlp_pallas.1} parent=0
    #allocation3 [shape = 'u8[16384]{0}', space=vmem, size = 0x4000, scoped, tag = 'input window, operand 0, single buffered']
    #allocation4 [shape = 's32[1]{0}', space=sflag, size = 0x4, scoped, tag = 'scoped memory for mlp_pallas.1']
    #allocation5 [shape = 's32[1]{0}', space=sflag, size = 0x4, scoped, tag = 'scoped memory for mlp_pallas.1']
    #allocation6 [shape = 'u8[131072]{0}', space=vmem, size = 0x20000, scoped, tag = 'input window, operand 1, single buffered']
    #allocation7 [shape = 's32[1]{0}', space=sflag, size = 0x4, scoped, tag = 'scoped memory for mlp_pallas.1']
    #allocation8 [shape = 'u8[131072]{0}', space=vmem, size = 0x20000, scoped, tag = 'input window, operand 3, single buffered']
    #allocation9 [shape = 'u8[16384]{0}', space=vmem, size = 0x4000, scoped, tag = 'output window, operand 0, single buffered']
    %10 = vsyncpa [#allocation4], 0
    %11 = vsyncpa [#allocation7], 0
    %12 = vsyncpa [#allocation5], 0
    // Predicated region
    $region2: #{mlp_pallas.1} parent=1 // pred_check
      _
    $region3: #{mlp_pallas.1} parent=1 // pred_check_branch
      %14 = sbr.rel (0) target = $region5
    $region4: #{mlp_pallas.1} parent=1 // pred_region
      %s16 = ssub.s32 512, 512
      %17 = vsyncadd [#allocation4], %s16
      %s18 = sshll.u32 [#allocation3], 4
      %s19 = int_to_ptr.vmem [resolvable:$true] %s18
      %24 = dma.hbm_to_vmem [thread:$0]  %s0, 512, %s19, [#allocation4], 128, 128, 8
    $region5: #{mlp_pallas.1} parent=1 // pred_fallthru
      _
    // Predicated region
    $region6: #{mlp_pallas.1} parent=1 // pred_check
      _
    $region7: #{mlp_pallas.1} parent=1 // pred_check_branch
      %26 = sbr.rel (0) target = $region9
    $region8: #{mlp_pallas.1} parent=1 // pred_region
      %s28 = ssub.s32 4096, 4096
      %29 = vsyncadd [#allocation7], %s28
      %s30 = sshll.u32 [#allocation6], 4
      %s31 = int_to_ptr.vmem [resolvable:$true] %s30
      %36 = dma.hbm_to_vmem [thread:$0]  %s1, 4096, %s31, [#allocation7], 256, 256, 16
    $region9: #{mlp_pallas.1} parent=1 // pred_fallthru
      _
    // Predicated region
    $region10: #{mlp_pallas.1} parent=1 // pred_check
      _
    $region11: #{mlp_pallas.1} parent=1 // pred_check_branch
      %38 = sbr.rel (0) target = $region13
    $region12: #{mlp_pallas.1} parent=1 // pred_region
      _
    $region13: #{mlp_pallas.1} parent=1 // pred_fallthru
      _
    // Predicated region
    $region14: #{mlp_pallas.1} parent=1 // pred_check
      _
    $region15: #{mlp_pallas.1} parent=1 // pred_check_branch
      %40 = sbr.rel (0) target = $region17
    $region16: #{mlp_pallas.1} parent=1 // pred_region
      %s42 = ssub.s32 4096, 4096
      %43 = vsyncadd [#allocation7], %s42
      %s44 = sshll.u32 [#allocation8], 4
      %s45 = int_to_ptr.vmem [resolvable:$true] %s44
      %50 = dma.hbm_to_vmem [thread:$0]  %s3, 4096, %s45, [#allocation7], 128, 128, 8
    $region17: #{mlp_pallas.1} parent=1 // pred_fallthru
      _
    // Predicated region
    $region18: #{mlp_pallas.1} parent=1 // pred_check
      _
    $region19: #{mlp_pallas.1} parent=1 // pred_check_branch
      %52 = sbr.rel (0) target = $region21
    $region20: #{mlp_pallas.1} parent=1 // pred_region
      _
    $region21: #{mlp_pallas.1} parent=1 // pred_fallthru
      _
    // Predicated region
    $region22: #{mlp_pallas.1} parent=1 // pred_check
      _
    $region23: #{mlp_pallas.1} parent=1 // pred_check_branch
      %54 = sbr.rel (0) target = $region25
    $region24: #{mlp_pallas.1} parent=1 // pred_region
      %55 = dma.done [#allocation4], 512
    $region25: #{mlp_pallas.1} parent=1 // pred_fallthru
      _
    // Predicated region
    $region26: #{mlp_pallas.1} parent=1 // pred_check
      _
    $region27: #{mlp_pallas.1} parent=1 // pred_check_branch
      %57 = sbr.rel (0) target = $region29
    $region28: #{mlp_pallas.1} parent=1 // pred_region
      %58 = dma.done [#allocation7], 4096
    $region29: #{mlp_pallas.1} parent=1 // pred_fallthru
      _
    // Predicated region
    $region30: #{mlp_pallas.1} parent=1 // pred_check
      _
    $region31: #{mlp_pallas.1} parent=1 // pred_check_branch
      %60 = sbr.rel (0) target = $region33
    $region32: #{mlp_pallas.1} parent=1 // pred_region
      %61 = dma.done [#allocation7], 4096
    $region33: #{mlp_pallas.1} parent=1 // pred_fallthru
      _
    %p62 = scmp.eq.s32.totalorder 0, 0
    // Predicated region
    $region34: #{mlp_pallas.1} parent=1 // pred_check
      %p63 = pneg %p62
    $region35: #{mlp_pallas.1} parent=1 // pred_check_branch
      %65 = sbr.rel (%p63) target = $region37
    $region36: #{mlp_pallas.1} parent=1 // pred_region
      %66 = vst [vmem:[#allocation2] sm:$0xff] 0.0
      %67 = vst [vmem:[#allocation2 + $0x8] sm:$0xff] 0.0
      %68 = vst [vmem:[#allocation2 + $0x10] sm:$0xff] 0.0
      %69 = vst [vmem:[#allocation2 + $0x18] sm:$0xff] 0.0
    $region37: #{mlp_pallas.1} parent=1 // pred_fallthru
      _
    %v70 = vld [vmem:[#allocation3] sm:$0xff]
    %v71 = vld [vmem:[#allocation3 + $0x8] sm:$0xff]
    %v72 = vld [vmem:[#allocation3 + $0x10] sm:$0xff]
    %v73 = vld [vmem:[#allocation3 + $0x18] sm:$0xff]
    %v74 = vld [vmem:[#allocation6] sm:$0xff]
    %v75 = vld [vmem:[#allocation6 + $0x8] sm:$0xff]
    %v76 = vld [vmem:[#allocation6 + $0x10] sm:$0xff]
    %v77 = vld [vmem:[#allocation6 + $0x18] sm:$0xff]
    %v78 = vld [vmem:[#allocation6 + $0x20] sm:$0xff]
    %v79 = vld [vmem:[#allocation6 + $0x28] sm:$0xff]
    %v80 = vld [vmem:[#allocation6 + $0x30] sm:$0xff]
    %v81 = vld [vmem:[#allocation6 + $0x38] sm:$0xff]
    %v82 = vld [vmem:[#allocation6 + $0x40] sm:$0xff]
    %v83 = vld [vmem:[#allocation6 + $0x48] sm:$0xff]
    %v84 = vld [vmem:[#allocation6 + $0x50] sm:$0xff]
    %v85 = vld [vmem:[#allocation6 + $0x58] sm:$0xff]
    %v86 = vld [vmem:[#allocation6 + $0x60] sm:$0xff]
    %v87 = vld [vmem:[#allocation6 + $0x68] sm:$0xff]
    %v88 = vld [vmem:[#allocation6 + $0x70] sm:$0xff]
    %v89 = vld [vmem:[#allocation6 + $0x78] sm:$0xff]
    %v90 = vld [vmem:[#allocation6 + $0x80] sm:$0xff]
    %v91 = vld [vmem:[#allocation6 + $0x88] sm:$0xff]
    %v92 = vld [vmem:[#allocation6 + $0x90] sm:$0xff]
    %v93 = vld [vmem:[#allocation6 + $0x98] sm:$0xff]
    %v94 = vld [vmem:[#allocation6 + $0xa0] sm:$0xff]
    %v95 = vld [vmem:[#allocation6 + $0xa8] sm:$0xff]
    %v96 = vld [vmem:[#allocation6 + $0xb0] sm:$0xff]
    %v97 = vld [vmem:[#allocation6 + $0xb8] sm:$0xff]
    %v98 = vld [vmem:[#allocation6 + $0xc0] sm:$0xff]
    %v99 = vld [vmem:[#allocation6 + $0xc8] sm:$0xff]
    %v100 = vld [vmem:[#allocation6 + $0xd0] sm:$0xff]
    %v101 = vld [vmem:[#allocation6 + $0xd8] sm:$0xff]
    %v102 = vld [vmem:[#allocation6 + $0xe0] sm:$0xff]
    %v103 = vld [vmem:[#allocation6 + $0xe8] sm:$0xff]
    %v104 = vld [vmem:[#allocation6 + $0xf0] sm:$0xff]
    %v105 = vld [vmem:[#allocation6 + $0xf8] sm:$0xff]
    %v106 = vld [vmem:[%s2] sm:$0x3]
    %v108 = vlaneseq
    %v109 = vshrl.u32 %v108, 7
    %v110 = vsub.s32 0, %v109
    %v111 = vrot.slane %v106, %v110
    %v112 = vlaneseq
    %v113 = vshrl.u32 %v112, 7
    %v114 = vsub.s32 1, %v113
    %v115 = vrot.slane %v106, %v114
    %118 = vmatprep.subr.mxu0 %v75
    %119 = vmatpush1.msra.mxu0 %v74
    %120 = vmatprep.subr.mxu0 %v77
    %121 = vmatpush1.msra.mxu0 %v76
    %122 = vmatprep.subr.mxu0 %v79
    %123 = vmatpush1.msra.mxu0 %v78
    %124 = vmatprep.subr.mxu0 %v81
    %125 = vmatpush1.msra.mxu0 %v80
    %126 = vmatprep.subr.mxu0 %v83
    %127 = vmatpush1.msra.mxu0 %v82
    %128 = vmatprep.subr.mxu0 %v85
    %129 = vmatpush1.msra.mxu0 %v84
    %130 = vmatprep.subr.mxu0 %v87
    %131 = vmatpush1.msra.mxu0 %v86
    %132 = vmatprep.subr.mxu0 %v89
    %133 = vmatpush1.msra.mxu0 %v88
    %134 = vmatprep.subr.mxu0 %v91
    %135 = vmatpush1.msra.mxu0 %v90
    %136 = vmatprep.subr.mxu0 %v93
    %137 = vmatpush1.msra.mxu0 %v92
    %138 = vmatprep.subr.mxu0 %v95
    %139 = vmatpush1.msra.mxu0 %v94
    %140 = vmatprep.subr.mxu0 %v97
    %141 = vmatpush1.msra.mxu0 %v96
    %142 = vmatprep.subr.mxu0 %v99
    %143 = vmatpush1.msra.mxu0 %v98
    %144 = vmatprep.subr.mxu0 %v101
    %145 = vmatpush1.msra.mxu0 %v100
    %146 = vmatprep.subr.mxu0 %v103
    %147 = vmatpush1.msra.mxu0 %v102
    %148 = vmatprep.subr.mxu0 %v105
    %149 = vmatpush1.msra.mxu0 %v104
    %150 = vmatprep.subr.mxu0 0.0
    %151 = vmatpush1.msra.mxu0 0.0
    %152 = vmatprep.subr.mxu0 0.0
    %153 = vmatpush1.msra.mxu0 0.0
    %154 = vmatprep.subr.mxu0 0.0
    %155 = vmatpush1.msra.mxu0 0.0
    %156 = vmatprep.subr.mxu0 0.0
    %157 = vmatpush1.msra.mxu0 0.0
    %158 = vmatprep.subr.mxu0 0.0
    %159 = vmatpush1.msra.mxu0 0.0
    %160 = vmatprep.subr.mxu0 0.0
    %161 = vmatpush1.msra.mxu0 0.0
    %162 = vmatprep.subr.mxu0 0.0
    %163 = vmatpush1.msra.mxu0 0.0
    %164 = vmatprep.subr.mxu0 0.0
    %165 = vmatpush1.msra.mxu0 0.0
    %166 = vmatprep.subr.mxu0 0.0
    %167 = vmatpush1.msra.mxu0 0.0
    %168 = vmatprep.subr.mxu0 0.0
    %169 = vmatpush1.msra.mxu0 0.0
    %170 = vmatprep.subr.mxu0 0.0
    %171 = vmatpush1.msra.mxu0 0.0
    %172 = vmatprep.subr.mxu0 0.0
    %173 = vmatpush1.msra.mxu0 0.0
    %174 = vmatprep.subr.mxu0 0.0
    %175 = vmatpush1.msra.mxu0 0.0
    %176 = vmatprep.subr.mxu0 0.0
    %177 = vmatpush1.msra.mxu0 0.0
    %178 = vmatprep.subr.mxu0 0.0
    %179 = vmatpush1.msra.mxu0 0.0
    %180 = vmatprep.subr.mxu0 0.0
    %181 = vmatpush1.msra.mxu0 0.0
    %182 = vmatprep.mubr.f32.mxu0 0.0
    %183 = vmatmul.mubr.f32.gmra.mrb[0].mxu0 %v70
    %v184 = vpop.f32.mrb[0].mxu0
    %v185 = vadd.f32 %v111, %v184
    %v186 = vpop.f32.mrb[0].mxu0
    %v187 = vadd.f32 %v115, %v186
    %188 = vmatprep.mubr.f32.mxu0 0.0
    %189 = vmatmul.mubr.f32.gmra.mrb[0].mxu0 %v71
    %v190 = vpop.f32.mrb[0].mxu0
    %v191 = vadd.f32 %v111, %v190
    %v192 = vpop.f32.mrb[0].mxu0
    %v193 = vadd.f32 %v115, %v192
    %194 = vmatprep.mubr.f32.mxu0 0.0
    %195 = vmatmul.mubr.f32.gmra.mrb[0].mxu0 %v72
    %v196 = vpop.f32.mrb[0].mxu0
    %v197 = vadd.f32 %v111, %v196
    %v198 = vpop.f32.mrb[0].mxu0
    %v199 = vadd.f32 %v115, %v198
    %200 = vmatprep.mubr.f32.mxu0 0.0
    %201 = vmatmul.mubr.f32.gmra.mrb[0].mxu0 %v73
    %v202 = vpop.f32.mrb[0].mxu0
    %v203 = vadd.f32 %v111, %v202
    %v204 = vpop.f32.mrb[0].mxu0
    %v205 = vadd.f32 %v115, %v204
    %206 = vdwg.mxu0
    %v207 = vmul.f32 %v185, 0.5
    %v208 = vmul.f32 %v187, 0.5
    %v209 = vmul.f32 %v191, 0.5
    %v210 = vmul.f32 %v193, 0.5
    %v211 = vmul.f32 %v197, 0.5
    %v212 = vmul.f32 %v199, 0.5
    %v213 = vmul.f32 %v203, 0.5
    %v214 = vmul.f32 %v205, 0.5
    %v215 = vmul.f32 %v185, 0.70710677
    %v216 = vmul.f32 %v187, 0.70710677
    %v217 = vmul.f32 %v191, 0.70710677
    %v218 = vmul.f32 %v193, 0.70710677
    %v219 = vmul.f32 %v197, 0.70710677
    %v220 = vmul.f32 %v199, 0.70710677
    %v221 = vmul.f32 %v203, 0.70710677
    %v222 = vmul.f32 %v205, 0.70710677
    %v223 = verf.f32.pop %v215
    %v224 = verf.f32.pop %v216
    %v225 = verf.f32.pop %v217
    %v226 = verf.f32.pop %v218
    %v227 = verf.f32.pop %v219
    %v228 = verf.f32.pop %v220
    %v229 = verf.f32.pop %v221
    %v230 = verf.f32.pop %v222
    %v231 = vadd.f32 %v223, 1.0
    %v232 = vadd.f32 %v224, 1.0
    %v233 = vadd.f32 %v225, 1.0
    %v234 = vadd.f32 %v226, 1.0
    %v235 = vadd.f32 %v227, 1.0
    %v236 = vadd.f32 %v228, 1.0
    %v237 = vadd.f32 %v229, 1.0
    %v238 = vadd.f32 %v230, 1.0
    %v239 = vmul.f32 %v207, %v231
    %v240 = vmul.f32 %v208, %v232
    %v241 = vmul.f32 %v209, %v233
    %v242 = vmul.f32 %v210, %v234
    %v243 = vmul.f32 %v211, %v235
    %v244 = vmul.f32 %v212, %v236
    %v245 = vmul.f32 %v213, %v237
    %v246 = vmul.f32 %v214, %v238
    %v247 = vld [vmem:[#allocation2] sm:$0xff]
    %v248 = vld [vmem:[#allocation2 + $0x8] sm:$0xff]
    %v249 = vld [vmem:[#allocation2 + $0x10] sm:$0xff]
    %v250 = vld [vmem:[#allocation2 + $0x18] sm:$0xff]
    %v251 = vld [vmem:[#allocation8] sm:$0xff]
    %v252 = vld [vmem:[#allocation8 + $0x8] sm:$0xff]
    %v253 = vld [vmem:[#allocation8 + $0x10] sm:$0xff]
    %v254 = vld [vmem:[#allocation8 + $0x18] sm:$0xff]
    %v255 = vld [vmem:[#allocation8 + $0x20] sm:$0xff]
    %v256 = vld [vmem:[#allocation8 + $0x28] sm:$0xff]
    %v257 = vld [vmem:[#allocation8 + $0x30] sm:$0xff]
    %v258 = vld [vmem:[#allocation8 + $0x38] sm:$0xff]
    %v259 = vld [vmem:[#allocation8 + $0x40] sm:$0xff]
    %v260 = vld [vmem:[#allocation8 + $0x48] sm:$0xff]
    %v261 = vld [vmem:[#allocation8 + $0x50] sm:$0xff]
    %v262 = vld [vmem:[#allocation8 + $0x58] sm:$0xff]
    %v263 = vld [vmem:[#allocation8 + $0x60] sm:$0xff]
    %v264 = vld [vmem:[#allocation8 + $0x68] sm:$0xff]
    %v265 = vld [vmem:[#allocation8 + $0x70] sm:$0xff]
    %v266 = vld [vmem:[#allocation8 + $0x78] sm:$0xff]
    %v267 = vld [vmem:[#allocation8 + $0x80] sm:$0xff]
    %v268 = vld [vmem:[#allocation8 + $0x88] sm:$0xff]
    %v269 = vld [vmem:[#allocation8 + $0x90] sm:$0xff]
    %v270 = vld [vmem:[#allocation8 + $0x98] sm:$0xff]
    %v271 = vld [vmem:[#allocation8 + $0xa0] sm:$0xff]
    %v272 = vld [vmem:[#allocation8 + $0xa8] sm:$0xff]
    %v273 = vld [vmem:[#allocation8 + $0xb0] sm:$0xff]
    %v274 = vld [vmem:[#allocation8 + $0xb8] sm:$0xff]
    %v275 = vld [vmem:[#allocation8 + $0xc0] sm:$0xff]
    %v276 = vld [vmem:[#allocation8 + $0xc8] sm:$0xff]
    %v277 = vld [vmem:[#allocation8 + $0xd0] sm:$0xff]
    %v278 = vld [vmem:[#allocation8 + $0xd8] sm:$0xff]
    %v279 = vld [vmem:[#allocation8 + $0xe0] sm:$0xff]
    %v280 = vld [vmem:[#allocation8 + $0xe8] sm:$0xff]
    %v281 = vld [vmem:[#allocation8 + $0xf0] sm:$0xff]
    %v282 = vld [vmem:[#allocation8 + $0xf8] sm:$0xff]
    %283 = vmatprep.subr.mxu0 0.0
    %284 = vmatpush1.msra.mxu0 %v251
    %285 = vmatprep.subr.mxu0 0.0
    %286 = vmatpush1.msra.mxu0 %v252
    %287 = vmatprep.subr.mxu0 0.0
    %288 = vmatpush1.msra.mxu0 %v253
    %289 = vmatprep.subr.mxu0 0.0
    %290 = vmatpush1.msra.mxu0 %v254
    %291 = vmatprep.subr.mxu0 0.0
    %292 = vmatpush1.msra.mxu0 %v255
    %293 = vmatprep.subr.mxu0 0.0
    %294 = vmatpush1.msra.mxu0 %v256
    %295 = vmatprep.subr.mxu0 0.0
    %296 = vmatpush1.msra.mxu0 %v257
    %297 = vmatprep.subr.mxu0 0.0
    %298 = vmatpush1.msra.mxu0 %v258
    %299 = vmatprep.subr.mxu0 0.0
    %300 = vmatpush1.msra.mxu0 %v259
    %301 = vmatprep.subr.mxu0 0.0
    %302 = vmatpush1.msra.mxu0 %v260
    %303 = vmatprep.subr.mxu0 0.0
    %304 = vmatpush1.msra.mxu0 %v261
    %305 = vmatprep.subr.mxu0 0.0
    %306 = vmatpush1.msra.mxu0 %v262
    %307 = vmatprep.subr.mxu0 0.0
    %308 = vmatpush1.msra.mxu0 %v263
    %309 = vmatprep.subr.mxu0 0.0
    %310 = vmatpush1.msra.mxu0 %v264
    %311 = vmatprep.subr.mxu0 0.0
    %312 = vmatpush1.msra.mxu0 %v265
    %313 = vmatprep.subr.mxu0 0.0
    %314 = vmatpush1.msra.mxu0 %v266
    %315 = vmatprep.subr.mxu0 0.0
    %316 = vmatpush1.msra.mxu0 %v267
    %317 = vmatprep.subr.mxu0 0.0
    %318 = vmatpush1.msra.mxu0 %v268
    %319 = vmatprep.subr.mxu0 0.0
    %320 = vmatpush1.msra.mxu0 %v269
    %321 = vmatprep.subr.mxu0 0.0
    %322 = vmatpush1.msra.mxu0 %v270
    %323 = vmatprep.subr.mxu0 0.0
    %324 = vmatpush1.msra.mxu0 %v271
    %325 = vmatprep.subr.mxu0 0.0
    %326 = vmatpush1.msra.mxu0 %v272
    %327 = vmatprep.subr.mxu0 0.0
    %328 = vmatpush1.msra.mxu0 %v273
    %329 = vmatprep.subr.mxu0 0.0
    %330 = vmatpush1.msra.mxu0 %v274
    %331 = vmatprep.subr.mxu0 0.0
    %332 = vmatpush1.msra.mxu0 %v275
    %333 = vmatprep.subr.mxu0 0.0
    %334 = vmatpush1.msra.mxu0 %v276
    %335 = vmatprep.subr.mxu0 0.0
    %336 = vmatpush1.msra.mxu0 %v277
    %337 = vmatprep.subr.mxu0 0.0
    %338 = vmatpush1.msra.mxu0 %v278
    %339 = vmatprep.subr.mxu0 0.0
    %340 = vmatpush1.msra.mxu0 %v279
    %341 = vmatprep.subr.mxu0 0.0
    %342 = vmatpush1.msra.mxu0 %v280
    %343 = vmatprep.subr.mxu0 0.0
    %344 = vmatpush1.msra.mxu0 %v281
    %345 = vmatprep.subr.mxu0 0.0
    %346 = vmatpush1.msra.mxu0 %v282
    %347 = vmatprep.mubr.f32.mxu0 %v240
    %348 = vmatmul.mubr.f32.gmra.mrb[0].mxu0 %v239
    %v349 = vpop.f32.mrb[0].mxu0
    %v350 = vadd.f32 0.0, %v349
    %v351 = vpop.f32.mrb[0].mxu0
    %352 = vmatprep.mubr.f32.mxu0 %v242
    %353 = vmatmul.mubr.f32.gmra.mrb[0].mxu0 %v241
    %v354 = vpop.f32.mrb[0].mxu0
    %v355 = vadd.f32 0.0, %v354
    %v356 = vpop.f32.mrb[0].mxu0
    %357 = vmatprep.mubr.f32.mxu0 %v244
    %358 = vmatmul.mubr.f32.gmra.mrb[0].mxu0 %v243
    %v359 = vpop.f32.mrb[0].mxu0
    %v360 = vadd.f32 0.0, %v359
    %v361 = vpop.f32.mrb[0].mxu0
    %362 = vmatprep.mubr.f32.mxu0 %v246
    %363 = vmatmul.mubr.f32.gmra.mrb[0].mxu0 %v245
    %v364 = vpop.f32.mrb[0].mxu0
    %v365 = vadd.f32 0.0, %v364
    %v366 = vpop.f32.mrb[0].mxu0
    %367 = vdwg.mxu0
    %v368 = vadd.f32 %v247, %v350
    %v369 = vadd.f32 %v248, %v355
    %v370 = vadd.f32 %v249, %v360
    %v371 = vadd.f32 %v250, %v365
    %372 = vst [vmem:[#allocation2] sm:$0xff] %v368
    %373 = vst [vmem:[#allocation2 + $0x8] sm:$0xff] %v369
    %374 = vst [vmem:[#allocation2 + $0x10] sm:$0xff] %v370
    %375 = vst [vmem:[#allocation2 + $0x18] sm:$0xff] %v371
    // Predicated region
    $region38: #{mlp_pallas.1} parent=1 // pred_check
      %p376 = pneg %p62
    $region39: #{mlp_pallas.1} parent=1 // pred_check_branch
      %378 = sbr.rel (%p376) target = $region41
    $region40: #{mlp_pallas.1} parent=1 // pred_region
      %v379 = vld [vmem:[#allocation2] sm:$0xff]
      %v380 = vld [vmem:[#allocation2 + $0x8] sm:$0xff]
      %v381 = vld [vmem:[#allocation2 + $0x10] sm:$0xff]
      %v382 = vld [vmem:[#allocation2 + $0x18] sm:$0xff]
      %v383 = vld [vmem:[%s4] sm:$0x1]
      %v385 = vlaneseq
      %v386 = vshrl.u32 %v385, 7
      %v387 = vsub.s32 0, %v386
      %v388 = vrot.slane %v383, %v387
      %v390 = vadd.f32 %v379, %v388
      %v391 = vadd.f32 %v380, %v388
      %v392 = vadd.f32 %v381, %v388
      %v393 = vadd.f32 %v382, %v388
      %394 = vst [vmem:[#allocation9] sm:$0xff] %v390
      %395 = vst [vmem:[#allocation9 + $0x8] sm:$0xff] %v391
      %396 = vst [vmem:[#allocation9 + $0x10] sm:$0xff] %v392
      %397 = vst [vmem:[#allocation9 + $0x18] sm:$0xff] %v393
    $region41: #{mlp_pallas.1} parent=1 // pred_fallthru
      _
    // Predicated region
    $region42: #{mlp_pallas.1} parent=1 // pred_check
      _
    $region43: #{mlp_pallas.1} parent=1 // pred_check_branch
      %399 = sbr.rel (0) target = $region45
    $region44: #{mlp_pallas.1} parent=1 // pred_region
      %s401 = ssub.s32 512, 512
      %402 = vsyncadd [#allocation5], %s401
      %s403 = sshll.u32 [#allocation9], 4
      %s404 = int_to_ptr.vmem [resolvable:$true] %s403
      %409 = dma.vmem_to_hbm [thread:$0]  %s404, 512, %s5, [#allocation5], 128, 128, 8
    $region45: #{mlp_pallas.1} parent=1 // pred_fallthru
      _
    // Predicated region
    $region46: #{mlp_pallas.1} parent=1 // pred_check
      _
    $region47: #{mlp_pallas.1} parent=1 // pred_check_branch
      %411 = sbr.rel (0) target = $region49
    $region48: #{mlp_pallas.1} parent=1 // pred_region
      %412 = dma.done [#allocation5], 512
    $region49: #{mlp_pallas.1} parent=1 // pred_fallthru
      _
    %413 = vsyncpa [#allocation4], 1
    %414 = vsyncpa [#allocation7], 1
    %415 = vsyncpa [#allocation5], 1

</llo_original>
